<compile_context>
chip_gen: v7x
topology: tpu7x:2x2x1
jax: 0.10.0
libtpu: 0.0.40
codegen_flags: <defaults>
</compile_context>

<pallas_src>
import functools

import jax
import jax.numpy as jnp
import numpy as np
from jax.experimental import pallas as pl
from jax.experimental.pallas import tpu as pltpu

LN_EPS = 1e-5
SQRT2_INV = 0.7071067811865476


def _erf_poly(z):
    # Abramowitz & Stegun 7.1.26, |error| <= 1.5e-7 for all z.
    a = jnp.abs(z)
    t = 1.0 / (1.0 + 0.3275911 * a)
    poly = t * (0.254829592 + t * (-0.284496736 + t * (1.421413741
               + t * (-1.453152027 + t * 1.061405429))))
    e = 1.0 - poly * jnp.exp(-a * a)
    return jnp.where(z >= 0.0, e, -e)


def _gelu_exact(x):
    # torch.nn.GELU default: x * Phi(x) = 0.5 * x * (1 + erf(x / sqrt(2))).
    return 0.5 * x * (1.0 + _erf_poly(x * SQRT2_INV))


def _channel_gate(xg, w1t, b1, w2, b2):
    """xg: (C,1) pooled LayerNorm vector -> (C,1) sigmoid channel gate."""
    h = jnp.sum(w1t * xg, axis=0, keepdims=True) + b1      # (1, Cr) sublane reduce
    h = _gelu_exact(h)
    logits = jnp.sum(w2 * h, axis=1, keepdims=True) + b2   # (C, 1) lane reduce
    return jax.nn.sigmoid(logits)


# ----------------------------------------------------------------------------
# Fused single-pass kernel: whole (C, HW) sample(s) resident per grid step.
# ----------------------------------------------------------------------------
def _biattn_fused_kernel(inv_hw, x_ref, gamma_ref, beta_ref, w1t_ref, b1_ref,
                         w2_ref, b2_ref, o_ref):
    # x_ref / o_ref: (bn, C, HWp), HWp on the lane axis (multiple of 128).
    gamma = gamma_ref[...]          # (C, 1)
    beta = beta_ref[...]            # (C, 1)
    w1t = w1t_ref[...]              # (C, Cr)
    b1 = b1_ref[...]                # (1, Cr)
    w2 = w2_ref[...]                # (C, Cr)
    b2 = b2_ref[...]                # (C, 1)

    bn = x_ref.shape[0]
    inv_c = 1.0 / float(x_ref.shape[1])

    def body(n, carry):
        x = x_ref[n].astype(jnp.float32)                    # (C, HWp)
        # One-pass LayerNorm statistics over the channel (sublane) axis.
        s1 = jnp.sum(x, axis=0, keepdims=True)              # (1, HWp)
        s2 = jnp.sum(x * x, axis=0, keepdims=True)          # (1, HWp)
        mu = s1 * inv_c
        var = s2 * inv_c - mu * mu
        rstd = jax.lax.rsqrt(var + LN_EPS)                  # (1, HWp)
        # Pooled spatial sum of z; padded (zero) columns contribute 0.
        z_sum = jnp.sum((x - mu) * rstd, axis=1, keepdims=True)   # (C, 1)
        # LayerNorm affine folded into the pooled vector (exact).
        xg = gamma * (z_sum * inv_hw) + beta                 # (C, 1)
        attn = _channel_gate(xg, w1t, b1, w2, b2)            # (C, 1)
        # Re-load x from VMEM for the gate (cuts the longest vreg live range;
        # the extra vld is free in this mem-bound kernel).
        o_ref[n] = (x_ref[n].astype(jnp.float32) * attn).astype(o_ref.dtype)
        return carry

    jax.lax.fori_loop(0, bn, body, None, unroll=min(2, bn))


# ----------------------------------------------------------------------------
# Two-pass HW-tiled path (large feature maps that don't fit one VMEM block).
# ----------------------------------------------------------------------------
def _biattn_attn_kernel(inv_hw, x_ref, gamma_ref, beta_ref, w1t_ref, b1_ref,
                        w2_ref, b2_ref, attn_ref, acc_ref):
    # grid = (N, nt); x_ref: (1, C, hw_tile); attn_ref: (1, C, 1); acc: (C, 1).
    t = pl.program_id(1)

    @pl.when(t == 0)
    def _():
        acc_ref[...] = jnp.zeros_like(acc_ref)

    x = x_ref[0].astype(jnp.float32)                         # (C, hw_tile)
    inv_c = 1.0 / float(x.shape[0])
    s1 = jnp.sum(x, axis=0, keepdims=True)
    s2 = jnp.sum(x * x, axis=0, keepdims=True)
    mu = s1 * inv_c
    var = s2 * inv_c - mu * mu
    rstd = jax.lax.rsqrt(var + LN_EPS)
    acc_ref[...] += jnp.sum((x - mu) * rstd, axis=1, keepdims=True)

    @pl.when(t == pl.num_programs(1) - 1)
    def _():
        xg = gamma_ref[...] * (acc_ref[...] * inv_hw) + beta_ref[...]
        attn_ref[0] = _channel_gate(xg, w1t_ref[...], b1_ref[...],
                                    w2_ref[...], b2_ref[...])


def _biattn_apply_kernel(x_ref, attn_ref, o_ref):
    # x_ref/o_ref: (1, C, hw_tile); attn_ref: (1, C, 1).
    o_ref[...] = (x_ref[...].astype(jnp.float32)
                  * attn_ref[...]).astype(o_ref.dtype)


# ----------------------------------------------------------------------------
# Wrapper
# ----------------------------------------------------------------------------
def _vmem_capacity_bytes():
    try:
        cap = getattr(pltpu.get_tpu_info(), "vmem_capacity_bytes", None)
        if cap:
            return int(cap)
    except Exception:
        pass
    return 64 * 1024 * 1024   # conservative fallback


def biattn_forward(x, gamma, beta, w1, b1, w2, b2, *, block_budget_bytes=None):
    """x: (N, C, H, W). Returns x * sigmoid(W2 @ gelu(W1 @ mean(LN_C(x))))."""
    N, C, H, W = x.shape
    HW = H * W
    HW_pad = pl.cdiv(HW, 128) * 128          # lane axis -> unmasked full vst
    Cr = w1.shape[0]
    itemsize = x.dtype.itemsize

    x3 = x.reshape(N, C, HW)                 # free reshape, no transpose
    if HW_pad != HW:
        x3 = jnp.pad(x3, ((0, 0), (0, 0), (0, HW_pad - HW)))

    f32 = jnp.float32
    gamma_c = gamma.reshape(C, 1).astype(f32)
    beta_c = beta.reshape(C, 1).astype(f32)
    w1t = jnp.transpose(w1).astype(f32)      # (C, Cr)
    b1_r = b1.reshape(1, Cr).astype(f32)
    w2_m = w2.astype(f32)                    # (C, Cr)
    b2_c = b2.reshape(C, 1).astype(f32)

    # Generation-aware VMEM budget for the double-buffered in+out blocks only
    # (f32 temporaries live in vregs, not VMEM).
    cap = _vmem_capacity_bytes()
    if block_budget_bytes is None:
        block_budget_bytes = (24 * 1024 * 1024 if cap <= 64 * 1024 * 1024
                              else 48 * 1024 * 1024)
    vmem_limit = int(min(cap, 2 * block_budget_bytes))

    inv_hw = 1.0 / float(HW)                 # divide by TRUE HW (lane padding)
    per_sample = 4 * C * HW_pad * itemsize   # (in + out) x double-buffered
    const2 = lambda *idx: (0, 0)

    if per_sample <= block_budget_bytes:
        # -------- fused single-pass path --------
        bn = max(1, block_budget_bytes // per_sample)
        if N >= 2:
            bn = min(bn, pl.cdiv(N, 2))      # >= 2 grid steps for dual-TC v7x
        bn = min(bn, N)
        n_steps = pl.cdiv(N, bn)
        Np = n_steps * bn
        xin = x3 if Np == N else jnp.pad(x3, ((0, Np - N), (0, 0), (0, 0)))

        out = pl.pallas_call(
            functools.partial(_biattn_fused_kernel, inv_hw),
            out_shape=jax.ShapeDtypeStruct((Np, C, HW_pad), x.dtype),
            grid_spec=pltpu.PrefetchScalarGridSpec(
                num_scalar_prefetch=0,
                grid=(n_steps,),
                in_specs=[
                    pl.BlockSpec((bn, C, HW_pad), lambda i: (i, 0, 0)),
                    pl.BlockSpec((C, 1), const2),    # LayerNorm gamma
                    pl.BlockSpec((C, 1), const2),    # LayerNorm beta
                    pl.BlockSpec((C, Cr), const2),   # global_reduce weight^T
                    pl.BlockSpec((1, Cr), const2),   # global_reduce bias
                    pl.BlockSpec((C, Cr), const2),   # channel_select weight
                    pl.BlockSpec((C, 1), const2),    # channel_select bias
                ],
                out_specs=pl.BlockSpec((bn, C, HW_pad), lambda i: (i, 0, 0)),
            ),
            compiler_params=pltpu.CompilerParams(
                dimension_semantics=("parallel",),
                vmem_limit_bytes=vmem_limit),
        )(xin, gamma_c, beta_c, w1t, b1_r, w2_m, b2_c)

        if Np != N or HW_pad != HW:
            out = out[:N, :, :HW]
        return out.reshape(N, C, H, W)

    # -------- two-pass HW-tiled path (large feature maps) --------
    hw_tile = max(128, (block_budget_bytes // (4 * C * itemsize)) // 128 * 128)
    hw_tile = min(hw_tile, HW_pad)
    nt = pl.cdiv(HW_pad, hw_tile)
    HW2 = nt * hw_tile
    if HW2 != HW_pad:
        x3 = jnp.pad(x3, ((0, 0), (0, 0), (0, HW2 - HW_pad)))

    # Pass A: accumulate pooled LayerNorm sum over HW tiles -> channel gate.
    attn = pl.pallas_call(
        functools.partial(_biattn_attn_kernel, inv_hw),
        out_shape=jax.ShapeDtypeStruct((N, C, 1), jnp.float32),
        grid_spec=pltpu.PrefetchScalarGridSpec(
            num_scalar_prefetch=0,
            grid=(N, nt),
            in_specs=[
                pl.BlockSpec((1, C, hw_tile), lambda n, t: (n, 0, t)),
                pl.BlockSpec((C, 1), const2),
                pl.BlockSpec((C, 1), const2),
                pl.BlockSpec((C, Cr), const2),
                pl.BlockSpec((1, Cr), const2),
                pl.BlockSpec((C, Cr), const2),
                pl.BlockSpec((C, 1), const2),
            ],
            out_specs=pl.BlockSpec((1, C, 1), lambda n, t: (n, 0, 0)),
            scratch_shapes=[pltpu.VMEM((C, 1), jnp.float32)],
        ),
        compiler_params=pltpu.CompilerParams(
            dimension_semantics=("parallel", "arbitrary"),
            vmem_limit_bytes=vmem_limit),
    )(x3, gamma_c, beta_c, w1t, b1_r, w2_m, b2_c)

    # Pass B: re-stream x and apply the per-channel gate.
    out = pl.pallas_call(
        _biattn_apply_kernel,
        out_shape=jax.ShapeDtypeStruct((N, C, HW2), x.dtype),
        grid_spec=pltpu.PrefetchScalarGridSpec(
            num_scalar_prefetch=0,
            grid=(N, nt),
            in_specs=[
                pl.BlockSpec((1, C, hw_tile), lambda n, t: (n, 0, t)),
                pl.BlockSpec((1, C, 1), lambda n, t: (n, 0, 0)),
            ],
            out_specs=pl.BlockSpec((1, C, hw_tile), lambda n, t: (n, 0, t)),
        ),
        compiler_params=pltpu.CompilerParams(
            dimension_semantics=("parallel", "parallel"),
            vmem_limit_bytes=vmem_limit),
    )(x3, attn)

    if HW2 != HW:
        out = out[:, :, :HW]
    return out.reshape(N, C, H, W)


class BiAttn:
    """JAX/Pallas port of the PyTorch BiAttn module's forward pass."""

    def __init__(self, in_channels, key, act_ratio=0.125):
        reduce_channels = max(1, int(in_channels * act_ratio))
        self.in_channels = in_channels
        self.reduce_channels = reduce_channels
        k1, k2, k3, k4 = jax.random.split(key, 4)
        # LayerNorm affine (PyTorch default init: ones / zeros).
        self.gamma = jnp.ones((in_channels,), jnp.float32)
        self.beta = jnp.zeros((in_channels,), jnp.float32)
        # Linear layers with PyTorch default U(+-1/sqrt(fan_in)) init.
        bd1 = 1.0 / float(np.sqrt(in_channels))
        self.w1 = jax.random.uniform(k1, (reduce_channels, in_channels),
                                     jnp.float32, -bd1, bd1)
        self.b1 = jax.random.uniform(k2, (reduce_channels,), jnp.float32,
                                     -bd1, bd1)
        bd2 = 1.0 / float(np.sqrt(reduce_channels))
        self.w2 = jax.random.uniform(k3, (in_channels, reduce_channels),
                                     jnp.float32, -bd2, bd2)
        self.b2 = jax.random.uniform(k4, (in_channels,), jnp.float32,
                                     -bd2, bd2)

    def __call__(self, x):
        return biattn_forward(x, self.gamma, self.beta,
                              self.w1, self.b1, self.w2, self.b2)


def biattn_reference(x, gamma, beta, w1, b1, w2, b2, eps=LN_EPS):
    """Pure-JAX mirror of the PyTorch forward (exact erf GELU)."""
    xt = jnp.transpose(x, (0, 2, 3, 1)).astype(jnp.float32)   # (N,H,W,C)
    mu = jnp.mean(xt, axis=-1, keepdims=True)
    var = jnp.mean((xt - mu) ** 2, axis=-1, keepdims=True)
    ln = (xt - mu) / jnp.sqrt(var + eps) * gamma + beta
    xg = jnp.mean(ln, axis=(1, 2), keepdims=True)              # (N,1,1,C)
    h = jax.nn.gelu(xg @ w1.T + b1, approximate=False)          # (N,1,1,Cr)
    attn = jax.nn.sigmoid(h @ w2.T + b2)                        # (N,1,1,C)
    out = jnp.transpose(x, (0, 2, 3, 1)).astype(jnp.float32) * attn
    return jnp.transpose(out, (0, 3, 1, 2)).astype(x.dtype)


if __name__ == "__main__":
    key = jax.random.PRNGKey(0)
    k_mod, k_x, k_x2 = jax.random.split(key, 3)

    # channels=32 (so reduce_channels = 32 * 0.125 = 4), batch=2, spatial=16.
    N, C, H, W = 2, 32, 16, 16
    x = jax.random.normal(k_x, (N, C, H, W), dtype=jnp.float32)

    mod = BiAttn(C, k_mod)
    ref = biattn_reference(x, mod.gamma, mod.beta,
                           mod.w1, mod.b1, mod.w2, mod.b2)

    # 1) Default (fused single-pass) path.
    out = jax.block_until_ready(mod(x))
    assert out.shape == x.shape
    np.testing.assert_allclose(np.asarray(out), np.asarray(ref),
                               rtol=1e-4, atol=1e-5)

    # 2) HW-tiled two-pass path (used for large feature maps), forced here by a
    #    tiny block budget so it is exercised and verified on the small shape.
    out_tiled = jax.block_until_ready(
        biattn_forward(x, mod.gamma, mod.beta, mod.w1, mod.b1, mod.w2, mod.b2,
                       block_budget_bytes=64 * 1024))
    np.testing.assert_allclose(np.asarray(out_tiled), np.asarray(ref),
                               rtol=1e-4, atol=1e-5)

    # 3) Odd batch + non-128-multiple spatial (exercises batch & lane padding).
    N2, H2, W2 = 3, 14, 14
    x2 = jax.random.normal(k_x2, (N2, C, H2, W2), dtype=jnp.float32)
    out2 = jax.block_until_ready(
        biattn_forward(x2, mod.gamma, mod.beta, mod.w1, mod.b1, mod.w2, mod.b2))
    ref2 = biattn_reference(x2, mod.gamma, mod.beta,
                            mod.w1, mod.b1, mod.w2, mod.b2)
    assert out2.shape == x2.shape
    np.testing.assert_allclose(np.asarray(out2), np.asarray(ref2),
                               rtol=1e-4, atol=1e-5)

    print("KERNEL_OK")
</pallas_src>

<mosaic_0001>
module attributes {stable_mosaic.version = 11 : i64} {
  func.func @_biattn_fused_kernel(%arg0: i32, %arg1: memref<1x32x256xf32, #tpu.memory_space<vmem>>, %arg2: memref<32x1xf32, #tpu.memory_space<vmem>>, %arg3: memref<32x1xf32, #tpu.memory_space<vmem>>, %arg4: memref<32x4xf32, #tpu.memory_space<vmem>>, %arg5: memref<1x4xf32, #tpu.memory_space<vmem>>, %arg6: memref<32x4xf32, #tpu.memory_space<vmem>>, %arg7: memref<32x1xf32, #tpu.memory_space<vmem>>, %arg8: memref<1x32x256xf32, #tpu.memory_space<vmem>>) attributes {dimension_semantics = [#tpu.dimension_semantics<parallel>], iteration_bounds = array<i64: 2>, scalar_prefetch = 0 : i64, scratch_operands = 0 : i64, tpu.core_type = #tpu.core_type<tc>, window_params = [{transform_indices = @transform_0, window_bounds = array<i64: 1, 32, 256>}, {pipeline_mode = #tpu.pipeline_mode<synchronous>, transform_indices = @transform_1, window_bounds = array<i64: 32, 1>}, {pipeline_mode = #tpu.pipeline_mode<synchronous>, transform_indices = @transform_2, window_bounds = array<i64: 32, 1>}, {pipeline_mode = #tpu.pipeline_mode<synchronous>, transform_indices = @transform_3, window_bounds = array<i64: 32, 4>}, {pipeline_mode = #tpu.pipeline_mode<synchronous>, transform_indices = @transform_4, window_bounds = array<i64: 1, 4>}, {pipeline_mode = #tpu.pipeline_mode<synchronous>, transform_indices = @transform_5, window_bounds = array<i64: 32, 4>}, {pipeline_mode = #tpu.pipeline_mode<synchronous>, transform_indices = @transform_6, window_bounds = array<i64: 32, 1>}, {transform_indices = @transform_7, window_bounds = array<i64: 1, 32, 256>}]} {
    %c0 = arith.constant 0 : index
    %c0_0 = arith.constant 0 : index
    %0 = vector.load %arg2[%c0, %c0_0] : memref<32x1xf32, #tpu.memory_space<vmem>>, vector<32x1xf32>
    %c0_1 = arith.constant 0 : index
    %c0_2 = arith.constant 0 : index
    %1 = vector.load %arg3[%c0_1, %c0_2] : memref<32x1xf32, #tpu.memory_space<vmem>>, vector<32x1xf32>
    %c0_3 = arith.constant 0 : index
    %c0_4 = arith.constant 0 : index
    %2 = vector.load %arg4[%c0_3, %c0_4] : memref<32x4xf32, #tpu.memory_space<vmem>>, vector<32x4xf32>
    %c0_5 = arith.constant 0 : index
    %c0_6 = arith.constant 0 : index
    %3 = vector.load %arg5[%c0_5, %c0_6] : memref<1x4xf32, #tpu.memory_space<vmem>>, vector<1x4xf32>
    %c0_7 = arith.constant 0 : index
    %c0_8 = arith.constant 0 : index
    %4 = vector.load %arg6[%c0_7, %c0_8] : memref<32x4xf32, #tpu.memory_space<vmem>>, vector<32x4xf32>
    %c0_9 = arith.constant 0 : index
    %c0_10 = arith.constant 0 : index
    %5 = vector.load %arg7[%c0_9, %c0_10] : memref<32x1xf32, #tpu.memory_space<vmem>>, vector<32x1xf32>
    %c0_i32 = arith.constant 0 : i32
    %6 = arith.index_cast %c0_i32 : i32 to index
    %c0_11 = arith.constant 0 : index
    %c0_12 = arith.constant 0 : index
    %7 = vector.load %arg1[%6, %c0_11, %c0_12] : memref<1x32x256xf32, #tpu.memory_space<vmem>>, vector<1x32x256xf32>
    %8 = vector.shape_cast %7 : vector<1x32x256xf32> to vector<32x256xf32>
    %cst = arith.constant dense<0.000000e+00> : vector<256xf32>
    %9 = vector.multi_reduction <add>, %8, %cst [0] : vector<32x256xf32> to vector<256xf32>
    %10 = vector.shape_cast %9 : vector<256xf32> to vector<1x256xf32>
    %11 = arith.mulf %8, %8 : vector<32x256xf32>
    %cst_13 = arith.constant dense<0.000000e+00> : vector<256xf32>
    %12 = vector.multi_reduction <add>, %11, %cst_13 [0] : vector<32x256xf32> to vector<256xf32>
    %13 = vector.shape_cast %12 : vector<256xf32> to vector<1x256xf32>
    %cst_14 = arith.constant 3.125000e-02 : f32
    %14 = vector.broadcast %cst_14 : f32 to vector<1x256xf32>
    %15 = arith.mulf %10, %14 : vector<1x256xf32>
    %cst_15 = arith.constant 3.125000e-02 : f32
    %16 = vector.broadcast %cst_15 : f32 to vector<1x256xf32>
    %17 = arith.mulf %13, %16 : vector<1x256xf32>
    %18 = arith.mulf %15, %15 : vector<1x256xf32>
    %19 = arith.subf %17, %18 : vector<1x256xf32>
    %cst_16 = arith.constant 9.99999974E-6 : f32
    %20 = vector.broadcast %cst_16 : f32 to vector<1x256xf32>
    %21 = arith.addf %19, %20 : vector<1x256xf32>
    %22 = math.rsqrt %21 : vector<1x256xf32>
    %23 = vector.broadcast %15 : vector<1x256xf32> to vector<32x256xf32>
    %24 = arith.subf %8, %23 : vector<32x256xf32>
    %25 = vector.broadcast %22 : vector<1x256xf32> to vector<32x256xf32>
    %26 = arith.mulf %24, %25 : vector<32x256xf32>
    %cst_17 = arith.constant dense<0.000000e+00> : vector<32xf32>
    %27 = vector.multi_reduction <add>, %26, %cst_17 [1] : vector<32x256xf32> to vector<32xf32>
    %28 = vector.shape_cast %27 : vector<32xf32> to vector<32x1xf32>
    %cst_18 = arith.constant 3.906250e-03 : f32
    %29 = vector.broadcast %cst_18 : f32 to vector<32x1xf32>
    %30 = arith.mulf %28, %29 : vector<32x1xf32>
    %31 = arith.mulf %0, %30 : vector<32x1xf32>
    %32 = arith.addf %31, %1 : vector<32x1xf32>
    %33 = vector.broadcast %32 : vector<32x1xf32> to vector<32x4xf32>
    %34 = arith.mulf %2, %33 : vector<32x4xf32>
    %cst_19 = arith.constant dense<0.000000e+00> : vector<4xf32>
    %35 = vector.multi_reduction <add>, %34, %cst_19 [0] : vector<32x4xf32> to vector<4xf32>
    %36 = vector.shape_cast %35 : vector<4xf32> to vector<1x4xf32>
    %37 = arith.addf %36, %3 : vector<1x4xf32>
    %cst_20 = arith.constant 5.000000e-01 : f32
    %38 = vector.broadcast %cst_20 : f32 to vector<1x4xf32>
    %39 = arith.mulf %38, %37 : vector<1x4xf32>
    %cst_21 = arith.constant 0.707106769 : f32
    %40 = vector.broadcast %cst_21 : f32 to vector<1x4xf32>
    %41 = arith.mulf %37, %40 : vector<1x4xf32>
    %42 = math.absf %41 : vector<1x4xf32>
    %cst_22 = arith.constant 0.327591091 : f32
    %43 = vector.broadcast %cst_22 : f32 to vector<1x4xf32>
    %44 = arith.mulf %43, %42 : vector<1x4xf32>
    %cst_23 = arith.constant 1.000000e+00 : f32
    %45 = vector.broadcast %cst_23 : f32 to vector<1x4xf32>
    %46 = arith.addf %45, %44 : vector<1x4xf32>
    %cst_24 = arith.constant 1.000000e+00 : f32
    %47 = vector.broadcast %cst_24 : f32 to vector<1x4xf32>
    %48 = arith.divf %47, %46 : vector<1x4xf32>
    %cst_25 = arith.constant 1.06140542 : f32
    %49 = vector.broadcast %cst_25 : f32 to vector<1x4xf32>
    %50 = arith.mulf %48, %49 : vector<1x4xf32>
    %cst_26 = arith.constant -1.45315206 : f32
    %51 = vector.broadcast %cst_26 : f32 to vector<1x4xf32>
    %52 = arith.addf %51, %50 : vector<1x4xf32>
    %53 = arith.mulf %48, %52 : vector<1x4xf32>
    %cst_27 = arith.constant 1.42141378 : f32
    %54 = vector.broadcast %cst_27 : f32 to vector<1x4xf32>
    %55 = arith.addf %54, %53 : vector<1x4xf32>
    %56 = arith.mulf %48, %55 : vector<1x4xf32>
    %cst_28 = arith.constant -0.284496725 : f32
    %57 = vector.broadcast %cst_28 : f32 to vector<1x4xf32>
    %58 = arith.addf %57, %56 : vector<1x4xf32>
    %59 = arith.mulf %48, %58 : vector<1x4xf32>
    %cst_29 = arith.constant 0.254829586 : f32
    %60 = vector.broadcast %cst_29 : f32 to vector<1x4xf32>
    %61 = arith.addf %60, %59 : vector<1x4xf32>
    %62 = arith.mulf %48, %61 : vector<1x4xf32>
    %cst_30 = arith.constant 0.000000e+00 : f32
    %63 = vector.broadcast %cst_30 : f32 to vector<1x4xf32>
    %64 = arith.subf %63, %42 : vector<1x4xf32>
    %65 = arith.mulf %64, %42 : vector<1x4xf32>
    %66 = math.exp %65 : vector<1x4xf32>
    %67 = arith.mulf %62, %66 : vector<1x4xf32>
    %cst_31 = arith.constant 1.000000e+00 : f32
    %68 = vector.broadcast %cst_31 : f32 to vector<1x4xf32>
    %69 = arith.subf %68, %67 : vector<1x4xf32>
    %cst_32 = arith.constant 0.000000e+00 : f32
    %70 = vector.broadcast %cst_32 : f32 to vector<1x4xf32>
    %71 = arith.cmpf oge, %41, %70 : vector<1x4xf32>
    %cst_33 = arith.constant 0.000000e+00 : f32
    %72 = vector.broadcast %cst_33 : f32 to vector<1x4xf32>
    %73 = arith.subf %72, %69 : vector<1x4xf32>
    %74 = arith.select %71, %69, %73 : vector<1x4xi1>, vector<1x4xf32>
    %cst_34 = arith.constant 1.000000e+00 : f32
    %75 = vector.broadcast %cst_34 : f32 to vector<1x4xf32>
    %76 = arith.addf %75, %74 : vector<1x4xf32>
    %77 = arith.mulf %39, %76 : vector<1x4xf32>
    %78 = vector.broadcast %77 : vector<1x4xf32> to vector<32x4xf32>
    %79 = arith.mulf %4, %78 : vector<32x4xf32>
    %cst_35 = arith.constant dense<0.000000e+00> : vector<32xf32>
    %80 = vector.multi_reduction <add>, %79, %cst_35 [1] : vector<32x4xf32> to vector<32xf32>
    %81 = vector.shape_cast %80 : vector<32xf32> to vector<32x1xf32>
    %82 = arith.addf %81, %5 : vector<32x1xf32>
    %83 = arith.negf %82 : vector<32x1xf32>
    %84 = math.exp %83 : vector<32x1xf32>
    %cst_36 = arith.constant 1.000000e+00 : f32
    %85 = vector.broadcast %cst_36 : f32 to vector<32x1xf32>
    %86 = arith.addf %85, %84 : vector<32x1xf32>
    %87 = arith.divf %85, %86 : vector<32x1xf32>
    %88 = arith.index_cast %c0_i32 : i32 to index
    %c0_37 = arith.constant 0 : index
    %c0_38 = arith.constant 0 : index
    %89 = vector.load %arg1[%88, %c0_37, %c0_38] : memref<1x32x256xf32, #tpu.memory_space<vmem>>, vector<1x32x256xf32>
    %90 = vector.shape_cast %89 : vector<1x32x256xf32> to vector<32x256xf32>
    %91 = vector.broadcast %87 : vector<32x1xf32> to vector<32x256xf32>
    %92 = arith.mulf %90, %91 : vector<32x256xf32>
    %93 = arith.index_cast %c0_i32 : i32 to index
    %c0_39 = arith.constant 0 : index
    %c0_40 = arith.constant 0 : index
    %94 = vector.load %arg8[%93, %c0_39, %c0_40] : memref<1x32x256xf32, #tpu.memory_space<vmem>>, vector<1x32x256xf32>
    %95 = vector.shape_cast %94 : vector<1x32x256xf32> to vector<32x256xf32>
    %96 = vector.shape_cast %92 : vector<32x256xf32> to vector<1x32x256xf32>
    tpu.vector_store %arg8[%93, %c0_39, %c0_40], %96 {strides = array<i32>} : memref<1x32x256xf32, #tpu.memory_space<vmem>>, vector<1x32x256xf32>,
    %c1_i32 = arith.constant 1 : i32
    return
  }
  func.func @transform_0(%arg0: i32) -> (i32, i32, i32) {
    %c0_i32 = arith.constant 0 : i32
    %c0_i32_0 = arith.constant 0 : i32
    %c0_i32_1 = arith.constant 0 : i32
    return %arg0, %c0_i32, %c0_i32_0 : i32, i32, i32
  }
  func.func @transform_1(%arg0: i32) -> (i32, i32) {
    %c0_i32 = arith.constant 0 : i32
    %c0_i32_0 = arith.constant 0 : i32
    %c0_i32_1 = arith.constant 0 : i32
    return %c0_i32, %c0_i32_0 : i32, i32
  }
  func.func @transform_2(%arg0: i32) -> (i32, i32) {
    %c0_i32 = arith.constant 0 : i32
    %c0_i32_0 = arith.constant 0 : i32
    %c0_i32_1 = arith.constant 0 : i32
    return %c0_i32, %c0_i32_0 : i32, i32
  }
  func.func @transform_3(%arg0: i32) -> (i32, i32) {
    %c0_i32 = arith.constant 0 : i32
    %c0_i32_0 = arith.constant 0 : i32
    %c0_i32_1 = arith.constant 0 : i32
    return %c0_i32, %c0_i32_0 : i32, i32
  }
  func.func @transform_4(%arg0: i32) -> (i32, i32) {
    %c0_i32 = arith.constant 0 : i32
    %c0_i32_0 = arith.constant 0 : i32
    %c0_i32_1 = arith.constant 0 : i32
    return %c0_i32, %c0_i32_0 : i32, i32
  }
  func.func @transform_5(%arg0: i32) -> (i32, i32) {
    %c0_i32 = arith.constant 0 : i32
    %c0_i32_0 = arith.constant 0 : i32
    %c0_i32_1 = arith.constant 0 : i32
    return %c0_i32, %c0_i32_0 : i32, i32
  }
  func.func @transform_6(%arg0: i32) -> (i32, i32) {
    %c0_i32 = arith.constant 0 : i32
    %c0_i32_0 = arith.constant 0 : i32
    %c0_i32_1 = arith.constant 0 : i32
    return %c0_i32, %c0_i32_0 : i32, i32
  }
  func.func @transform_7(%arg0: i32) -> (i32, i32, i32) {
    %c0_i32 = arith.constant 0 : i32
    %c0_i32_0 = arith.constant 0 : i32
    %c0_i32_1 = arith.constant 0 : i32
    return %arg0, %c0_i32, %c0_i32_0 : i32, i32, i32
  }
}

</mosaic_0001>

<llo_original>
// kernel: tpu_custom_call.1
$region0: #{tpu_custom_call.1}
  #allocation0 [shape = 'u32[]', space=smem, size = 0x4, offset = 0x4, fixed_abs, tag = 'smem constant byte address 0x4 - core index']
  #allocation1 [shape = 'u32[144,128]{1,0:T(1,128)}', space=vmem, size = 0x12000, scoped, tag = 'internal scratch']
  %s0 = inlined_call_operand.vmem [shape: f32[2,32,256], index: 0, kind: input, shape index: {}]
  %s1 = inlined_call_operand.vmem [shape: f32[32,1], index: 1, kind: input, shape index: {}]
  %s2 = inlined_call_operand.vmem [shape: f32[32,1], index: 2, kind: input, shape index: {}]
  %s3 = inlined_call_operand.vmem [shape: f32[32,4], index: 3, kind: input, shape index: {}]
  %s4 = inlined_call_operand.vmem [shape: f32[1,4], index: 4, kind: input, shape index: {}]
  %s5 = inlined_call_operand.vmem [shape: f32[32,4], index: 5, kind: input, shape index: {}]
  %s6 = inlined_call_operand.vmem [shape: f32[32,1], index: 6, kind: input, shape index: {}]
  %s7 = inlined_call_operand.hbm [shape: f32[2,32,256], index: 7, kind: output, shape index: {}]
  %s8 = sld [smem:[#allocation0]]
  $region61: #{tpu_custom_call.1} parent=0
    _
  %s10 = ssub.s32 1, %s8
  %s11 = scalar_select 0, %s10, %s8
  $region1: #{tpu_custom_call.1} parent=0
    #allocation2 [shape = 'u8[65536]{0}', space=vmem, size = 0x10000, scoped, tag = 'output window, operand 0']
    #allocation3 [shape = 's32[2]{0}', space=sflag, size = 0x8, scoped, tag = 'scoped memory for tpu_custom_call.1']
    %12 = vsyncpa [#allocation3], 0
    %s13 = scalar_lea.sflag [#allocation3], 1
    %14 = vsyncpa %s13, 0
    loop: start=0, step=1, limit=4
    $region2: #{tpu_custom_call.1} parent=1 // loop_pre_header
      _
    $region3: #{tpu_custom_call.1} parent=1 // loop_header
      %s16 = sphi 0, %s20
      %p17 = scmp.ge.s32.totalorder %s16, 4
      %s26 = sphi 0, %s28
      %s29 = sphi 0, %s26
      %s30 = sphi 0, %s29
      %s46 = sphi 0, %s30
      %s50 = sphi 0, %s50
      %s52 = sphi 0, %s50
      %s53 = sphi 0, %s52
      %s67 = sphi 0, %s53
      %s71 = sphi 0, %s71
      %s73 = sphi 0, %s71
      %s74 = sphi 0, %s73
      %s88 = sphi 0, %s74
      %s92 = sphi 0, %s92
      %s94 = sphi 0, %s92
      %s95 = sphi 0, %s94
      %s109 = sphi 0, %s95
      %s113 = sphi 0, %s113
      %s115 = sphi 0, %s113
      %s116 = sphi 0, %s115
      %s130 = sphi 0, %s116
      %s134 = sphi 0, %s134
      %s136 = sphi 0, %s134
      %s137 = sphi 0, %s136
      %s151 = sphi 0, %s137
      %s155 = sphi 0, %s155
      %s157 = sphi 0, %s155
      %s158 = sphi 0, %s157
      %s172 = sphi 0, %s158
      %s178 = sphi 0, %s180
      %s181 = sphi 0, %s178
      %s182 = sphi 0, %s181
      %s198 = sphi 0, %s182
    $region4: #{tpu_custom_call.1} parent=1 // loop_header_branch
      %19 = sbr.rel (%p17) target = $region8
    $region5: #{tpu_custom_call.1} parent=1 // loop_body
      %s21 = ssub.s32 %s16, 1
      %s22 = ssub.s32 %s16, 2
      %s23 = sadd.s32 %s16, 1
      %s24 = ssub.s32 %s16, %s23
      %p25 = scmp.eq.s32.totalorder %s24, 0
      %s27 = sadd.s32 %s26, 1
      %s28 = scalar_select %p25, %s26, %s27
      %p31 = pneg %p25
      %p32 = scmp.eq.s32.totalorder %s16, 1
      %p33 = por %p31, %p32
      %p34 = scmp.ne.s32.totalorder %s26, %s29
      %p35 = scmp.eq.s32.totalorder %s16, 0
      %p36 = por %p34, %p35
      %p37 = scmp.ne.s32.totalorder %s26, %s29
      %p38 = scmp.eq.s32.totalorder %s21, 1
      %p39 = por %p37, %p38
      %p40 = scmp.ne.s32.totalorder %s29, %s30
      %p41 = scmp.eq.s32.totalorder %s21, 0
      %p42 = por %p40, %p41
      %p43 = scmp.ne.s32.totalorder %s29, %s30
      %p44 = scmp.eq.s32.totalorder %s22, 1
      %p45 = por %p43, %p44
      %p47 = scmp.ne.s32.totalorder %s30, %s46
      %p48 = scmp.eq.s32.totalorder %s22, 0
      %p49 = por %p47, %p48
      %s51 = sadd.s32 %s50, 1
      %p54 = scmp.eq.s32.totalorder %s16, 1
      %p55 = scmp.ne.s32.totalorder %s50, %s52
      %p56 = scmp.eq.s32.totalorder %s16, 0
      %p57 = por %p55, %p56
      %p58 = scmp.ne.s32.totalorder %s50, %s52
      %p59 = scmp.eq.s32.totalorder %s21, 1
      %p60 = por %p58, %p59
      %p61 = scmp.ne.s32.totalorder %s52, %s53
      %p62 = scmp.eq.s32.totalorder %s21, 0
      %p63 = por %p61, %p62
      %p64 = scmp.ne.s32.totalorder %s52, %s53
      %p65 = scmp.eq.s32.totalorder %s22, 1
      %p66 = por %p64, %p65
      %p68 = scmp.ne.s32.totalorder %s53, %s67
      %p69 = scmp.eq.s32.totalorder %s22, 0
      %p70 = por %p68, %p69
      %s72 = sadd.s32 %s71, 1
      %p75 = scmp.eq.s32.totalorder %s16, 1
      %p76 = scmp.ne.s32.totalorder %s71, %s73
      %p77 = scmp.eq.s32.totalorder %s16, 0
      %p78 = por %p76, %p77
      %p79 = scmp.ne.s32.totalorder %s71, %s73
      %p80 = scmp.eq.s32.totalorder %s21, 1
      %p81 = por %p79, %p80
      %p82 = scmp.ne.s32.totalorder %s73, %s74
      %p83 = scmp.eq.s32.totalorder %s21, 0
      %p84 = por %p82, %p83
      %p85 = scmp.ne.s32.totalorder %s73, %s74
      %p86 = scmp.eq.s32.totalorder %s22, 1
      %p87 = por %p85, %p86
      %p89 = scmp.ne.s32.totalorder %s74, %s88
      %p90 = scmp.eq.s32.totalorder %s22, 0
      %p91 = por %p89, %p90
      %s93 = sadd.s32 %s92, 1
      %p96 = scmp.eq.s32.totalorder %s16, 1
      %p97 = scmp.ne.s32.totalorder %s92, %s94
      %p98 = scmp.eq.s32.totalorder %s16, 0
      %p99 = por %p97, %p98
      %p100 = scmp.ne.s32.totalorder %s92, %s94
      %p101 = scmp.eq.s32.totalorder %s21, 1
      %p102 = por %p100, %p101
      %p103 = scmp.ne.s32.totalorder %s94, %s95
      %p104 = scmp.eq.s32.totalorder %s21, 0
      %p105 = por %p103, %p104
      %p106 = scmp.ne.s32.totalorder %s94, %s95
      %p107 = scmp.eq.s32.totalorder %s22, 1
      %p108 = por %p106, %p107
      %p110 = scmp.ne.s32.totalorder %s95, %s109
      %p111 = scmp.eq.s32.totalorder %s22, 0
      %p112 = por %p110, %p111
      %s114 = sadd.s32 %s113, 1
      %p117 = scmp.eq.s32.totalorder %s16, 1
      %p118 = scmp.ne.s32.totalorder %s113, %s115
      %p119 = scmp.eq.s32.totalorder %s16, 0
      %p120 = por %p118, %p119
      %p121 = scmp.ne.s32.totalorder %s113, %s115
      %p122 = scmp.eq.s32.totalorder %s21, 1
      %p123 = por %p121, %p122
      %p124 = scmp.ne.s32.totalorder %s115, %s116
      %p125 = scmp.eq.s32.totalorder %s21, 0
      %p126 = por %p124, %p125
      %p127 = scmp.ne.s32.totalorder %s115, %s116
      %p128 = scmp.eq.s32.totalorder %s22, 1
      %p129 = por %p127, %p128
      %p131 = scmp.ne.s32.totalorder %s116, %s130
      %p132 = scmp.eq.s32.totalorder %s22, 0
      %p133 = por %p131, %p132
      %s135 = sadd.s32 %s134, 1
      %p138 = scmp.eq.s32.totalorder %s16, 1
      %p139 = scmp.ne.s32.totalorder %s134, %s136
      %p140 = scmp.eq.s32.totalorder %s16, 0
      %p141 = por %p139, %p140
      %p142 = scmp.ne.s32.totalorder %s134, %s136
      %p143 = scmp.eq.s32.totalorder %s21, 1
      %p144 = por %p142, %p143
      %p145 = scmp.ne.s32.totalorder %s136, %s137
      %p146 = scmp.eq.s32.totalorder %s21, 0
      %p147 = por %p145, %p146
      %p148 = scmp.ne.s32.totalorder %s136, %s137
      %p149 = scmp.eq.s32.totalorder %s22, 1
      %p150 = por %p148, %p149
      %p152 = scmp.ne.s32.totalorder %s137, %s151
      %p153 = scmp.eq.s32.totalorder %s22, 0
      %p154 = por %p152, %p153
      %s156 = sadd.s32 %s155, 1
      %p159 = scmp.eq.s32.totalorder %s16, 1
      %p160 = scmp.ne.s32.totalorder %s155, %s157
      %p161 = scmp.eq.s32.totalorder %s16, 0
      %p162 = por %p160, %p161
      %p163 = scmp.ne.s32.totalorder %s155, %s157
      %p164 = scmp.eq.s32.totalorder %s21, 1
      %p165 = por %p163, %p164
      %p166 = scmp.ne.s32.totalorder %s157, %s158
      %p167 = scmp.eq.s32.totalorder %s21, 0
      %p168 = por %p166, %p167
      %p169 = scmp.ne.s32.totalorder %s157, %s158
      %p170 = scmp.eq.s32.totalorder %s22, 1
      %p171 = por %p169, %p170
      %p173 = scmp.ne.s32.totalorder %s158, %s172
      %p174 = scmp.eq.s32.totalorder %s22, 0
      %p175 = por %p173, %p174
      %s176 = ssub.s32 %s16, %s23
      %p177 = scmp.eq.s32.totalorder %s176, 0
      %s179 = sadd.s32 %s178, 1
      %s180 = scalar_select %p177, %s178, %s179
      %p183 = pneg %p177
      %p184 = scmp.eq.s32.totalorder %s16, 1
      %p185 = por %p183, %p184
      %p186 = scmp.ne.s32.totalorder %s178, %s181
      %p187 = scmp.eq.s32.totalorder %s16, 0
      %p188 = por %p186, %p187
      %p189 = scmp.ne.s32.totalorder %s178, %s181
      %p190 = scmp.eq.s32.totalorder %s21, 1
      %p191 = por %p189, %p190
      %p192 = scmp.ne.s32.totalorder %s181, %s182
      %p193 = scmp.eq.s32.totalorder %s21, 0
      %p194 = por %p192, %p193
      %p195 = scmp.ne.s32.totalorder %s181, %s182
      %p196 = scmp.eq.s32.totalorder %s22, 1
      %p197 = por %p195, %p196
      %p199 = scmp.ne.s32.totalorder %s182, %s198
      %p200 = scmp.eq.s32.totalorder %s22, 0
      %p201 = por %p199, %p200
      %p202 = scmp.le.s32.totalorder 1, %s16
      %p203 = scmp.lt.s32.totalorder %s16, 3
      %p204 = pnand %p202, %p203
      %p205 = pneg %p204
      // Predicated region
      $region9: #{tpu_custom_call.1} parent=5 // pred_check
        _
      $region10: #{tpu_custom_call.1} parent=5 // pred_check_branch
        %207 = sbr.rel (%p204) target = $region12
      $region11: #{tpu_custom_call.1} parent=5 // pred_region
        %s208 = ssub.s32 %s16, 1
        // Predicated region
        $region13: #{tpu_custom_call.1} parent=11 // pred_check
          %p209 = pneg %p63
        $region14: #{tpu_custom_call.1} parent=11 // pred_check_branch
          %211 = sbr.rel (%p209) target = $region16
        $region15: #{tpu_custom_call.1} parent=11 // pred_region
          _
        $region16: #{tpu_custom_call.1} parent=11 // pred_fallthru
          _
        // Predicated region
        $region17: #{tpu_custom_call.1} parent=11 // pred_check
          %p212 = pneg %p84
        $region18: #{tpu_custom_call.1} parent=11 // pred_check_branch
          %214 = sbr.rel (%p212) target = $region20
        $region19: #{tpu_custom_call.1} parent=11 // pred_region
          _
        $region20: #{tpu_custom_call.1} parent=11 // pred_fallthru
          _
        // Predicated region
        $region21: #{tpu_custom_call.1} parent=11 // pred_check
          %p215 = pneg %p105
        $region22: #{tpu_custom_call.1} parent=11 // pred_check_branch
          %217 = sbr.rel (%p215) target = $region24
        $region23: #{tpu_custom_call.1} parent=11 // pred_region
          _
        $region24: #{tpu_custom_call.1} parent=11 // pred_fallthru
          _
        // Predicated region
        $region25: #{tpu_custom_call.1} parent=11 // pred_check
          %p218 = pneg %p126
        $region26: #{tpu_custom_call.1} parent=11 // pred_check_branch
          %220 = sbr.rel (%p218) target = $region28
        $region27: #{tpu_custom_call.1} parent=11 // pred_region
          _
        $region28: #{tpu_custom_call.1} parent=11 // pred_fallthru
          _
        // Predicated region
        $region29: #{tpu_custom_call.1} parent=11 // pred_check
          %p221 = pneg %p147
        $region30: #{tpu_custom_call.1} parent=11 // pred_check_branch
          %223 = sbr.rel (%p221) target = $region32
        $region31: #{tpu_custom_call.1} parent=11 // pred_region
          _
        $region32: #{tpu_custom_call.1} parent=11 // pred_fallthru
          _
        // Predicated region
        $region33: #{tpu_custom_call.1} parent=11 // pred_check
          %p224 = pneg %p168
        $region34: #{tpu_custom_call.1} parent=11 // pred_check_branch
          %226 = sbr.rel (%p224) target = $region36
        $region35: #{tpu_custom_call.1} parent=11 // pred_region
          _
        $region36: #{tpu_custom_call.1} parent=11 // pred_fallthru
          _
      $region12: #{tpu_custom_call.1} parent=5 // pred_fallthru
        _
      %p227 = scmp.lt.s32.totalorder %s16, 2
      // Predicated region
      $region37: #{tpu_custom_call.1} parent=5 // pred_check
        %p228 = pneg %p227
      $region38: #{tpu_custom_call.1} parent=5 // pred_check_branch
        %230 = sbr.rel (%p228) target = $region40
      $region39: #{tpu_custom_call.1} parent=5 // pred_region
        // Predicated region
        $region41: #{tpu_custom_call.1} parent=39 // pred_check
          %p231 = pneg %p36
        $region42: #{tpu_custom_call.1} parent=39 // pred_check_branch
          %233 = sbr.rel (%p231) target = $region44
        $region43: #{tpu_custom_call.1} parent=39 // pred_region
          %p234 = scmp.lt.s32.totalorder %s16, 1
          %s235 = scalar_select %p234, %s16, 1
          %s236 = smul.addr %s235, 8
          %s237 = smul.addr %s236, 8
          %s238 = scalar_lea.vmem %s0, %s237
        $region44: #{tpu_custom_call.1} parent=39 // pred_fallthru
          _
      $region40: #{tpu_custom_call.1} parent=5 // pred_fallthru
        _
      %p239 = scmp.le.s32.totalorder 1, %s16
      %p240 = scmp.lt.s32.totalorder %s16, 3
      %p241 = pnand %p239, %p240
      %p242 = pneg %p241
      // Predicated region
      $region45: #{tpu_custom_call.1} parent=5 // pred_check
        _
      $region46: #{tpu_custom_call.1} parent=5 // pred_check_branch
        %244 = sbr.rel (%p241) target = $region48
      $region47: #{tpu_custom_call.1} parent=5 // pred_region
        %s245 = ssub.s32 %s16, 1
        %p246 = scmp.lt.s32.totalorder %s21, 1
        %s247 = scalar_select %p246, %s21, 1
        %s248 = smul.addr %s247, 8
        %s249 = smul.addr %s248, 8
        %s250 = scalar_lea.vmem %s0, %s249
        %p251 = pneg %p42
        %p252 = pneg %p39
        %p253 = pneg %p63
        %p254 = pneg %p60
        %p255 = pneg %p84
        %p256 = pneg %p81
        %p257 = pneg %p105
        %p258 = pneg %p102
        %p259 = pneg %p126
        %p260 = pneg %p123
        %p261 = pneg %p147
        %p262 = pneg %p144
        %p263 = pneg %p168
        %p264 = pneg %p165
        %p265 = pneg %p194
        %p266 = pneg %p191
        %s267 = sand.u32 %s181, 1
        %s268 = scalar_lea.sflag [#allocation3], %s267
        %s269 = sand.u32 %s181, 1
        %s270 = smul.addr %s269, 64
        %s271 = scalar_lea.vmem [#allocation2], %s270
        %p272 = scmp.lt.s32.totalorder %s21, 1
        %s273 = scalar_select %p272, %s21, 1
        %s274 = smul.addr %s273, 8
        %s275 = smul.addr %s274, 8
        %s276 = scalar_lea.vmem %s0, %s275
        %v277 = vld [vmem:[%s1] sm:$0xff]
        %v278 = vld [vmem:[%s1 + $0x8] sm:$0xff]
        %v279 = vld [vmem:[%s1 + $0x10] sm:$0xff]
        %v280 = vld [vmem:[%s1 + $0x18] sm:$0xff]
        %v281 = vld [vmem:[%s2] sm:$0xff]
        %v282 = vld [vmem:[%s2 + $0x8] sm:$0xff]
        %v283 = vld [vmem:[%s2 + $0x10] sm:$0xff]
        %v284 = vld [vmem:[%s2 + $0x18] sm:$0xff]
        %v285 = vld [vmem:[%s3] sm:$0xff]
        %v286 = vld [vmem:[%s3 + $0x8] sm:$0xff]
        %v287 = vld [vmem:[%s3 + $0x10] sm:$0xff]
        %v288 = vld [vmem:[%s3 + $0x18] sm:$0xff]
        %v289 = vld [vmem:[%s4] sm:$0x1]
        %v290 = vld [vmem:[%s5] sm:$0xff]
        %v291 = vld [vmem:[%s5 + $0x8] sm:$0xff]
        %v292 = vld [vmem:[%s5 + $0x10] sm:$0xff]
        %v293 = vld [vmem:[%s5 + $0x18] sm:$0xff]
        %v294 = vld [vmem:[%s6] sm:$0xff]
        %v295 = vld [vmem:[%s6 + $0x8] sm:$0xff]
        %v296 = vld [vmem:[%s6 + $0x10] sm:$0xff]
        %v297 = vld [vmem:[%s6 + $0x18] sm:$0xff]
        %v298 = vld [vmem:[%s276] sm:$0xff]
        %v299 = vld [vmem:[%s276 + $0x8] sm:$0xff]
        %v300 = vld [vmem:[%s276 + $0x10] sm:$0xff]
        %v301 = vld [vmem:[%s276 + $0x18] sm:$0xff]
        %v302 = vld [vmem:[%s276 + $0x20] sm:$0xff]
        %v303 = vld [vmem:[%s276 + $0x28] sm:$0xff]
        %v304 = vld [vmem:[%s276 + $0x30] sm:$0xff]
        %v305 = vld [vmem:[%s276 + $0x38] sm:$0xff]
        %v306 = vadd.f32 %v298, %v300
        %v307 = vadd.f32 %v306, %v302
        %v308 = vadd.f32 %v307, %v304
        %v309 = vrot.slane %v308, 4
        %v310 = vadd.f32 %v308, %v309
        %v311 = vrot.slane %v310, 2
        %v312 = vadd.f32 %v310, %v311
        %v313 = vrot.slane %v312, 1
        %v314 = vadd.f32 %v312, %v313
        %v315 = vadd.f32 %v299, %v301
        %v316 = vadd.f32 %v315, %v303
        %v317 = vadd.f32 %v316, %v305
        %v318 = vrot.slane %v317, 4
        %v319 = vadd.f32 %v317, %v318
        %v320 = vrot.slane %v319, 2
        %v321 = vadd.f32 %v319, %v320
        %v322 = vrot.slane %v321, 1
        %v323 = vadd.f32 %v321, %v322
        %v324 = vmul.f32 %v298, %v298
        %v325 = vmul.f32 %v299, %v299
        %v326 = vmul.f32 %v300, %v300
        %v327 = vmul.f32 %v301, %v301
        %v328 = vmul.f32 %v302, %v302
        %v329 = vmul.f32 %v303, %v303
        %v330 = vmul.f32 %v304, %v304
        %v331 = vmul.f32 %v305, %v305
        %v332 = vadd.f32 %v324, %v326
        %v333 = vadd.f32 %v332, %v328
        %v334 = vadd.f32 %v333, %v330
        %v335 = vrot.slane %v334, 4
        %v336 = vadd.f32 %v334, %v335
        %v337 = vrot.slane %v336, 2
        %v338 = vadd.f32 %v336, %v337
        %v339 = vrot.slane %v338, 1
        %v340 = vadd.f32 %v338, %v339
        %v341 = vadd.f32 %v325, %v327
        %v342 = vadd.f32 %v341, %v329
        %v343 = vadd.f32 %v342, %v331
        %v344 = vrot.slane %v343, 4
        %v345 = vadd.f32 %v343, %v344
        %v346 = vrot.slane %v345, 2
        %v347 = vadd.f32 %v345, %v346
        %v348 = vrot.slane %v347, 1
        %v349 = vadd.f32 %v347, %v348
        %v350 = vmul.f32 %v314, 0.03125
        %v351 = vmul.f32 %v323, 0.03125
        %v352 = vmul.f32 %v340, 0.03125
        %v353 = vmul.f32 %v349, 0.03125
        %v354 = vmul.f32 %v350, %v350
        %v355 = vmul.f32 %v351, %v351
        %v356 = vsub.f32 %v352, %v354
        %v357 = vsub.f32 %v353, %v355
        %v358 = vadd.f32 %v356, 1e-05
        %v359 = vadd.f32 %v357, 1e-05
        %v360 = vrsqrt.pop %v358
        %v361 = vrsqrt.pop %v359
        %v362 = vsub.f32 %v298, %v350
        %v363 = vsub.f32 %v299, %v351
        %v364 = vsub.f32 %v300, %v350
        %v365 = vsub.f32 %v301, %v351
        %v366 = vsub.f32 %v302, %v350
        %v367 = vsub.f32 %v303, %v351
        %v368 = vsub.f32 %v304, %v350
        %v369 = vsub.f32 %v305, %v351
        %v370 = vmul.f32 %v362, %v360
        %v371 = vmul.f32 %v363, %v361
        %v372 = vmul.f32 %v364, %v360
        %v373 = vmul.f32 %v365, %v361
        %v374 = vmul.f32 %v366, %v360
        %v375 = vmul.f32 %v367, %v361
        %v376 = vmul.f32 %v368, %v360
        %v377 = vmul.f32 %v369, %v361
        %v378 = vadd.f32 %v370, %v371
        %379 = vadd.xlane.f32.xlu0 %v378
        %v380 = vpop.xlane.xlu0 %379
        %v381 = vadd.f32 %v372, %v373
        %382 = vadd.xlane.f32.xlu0 %v381
        %v383 = vpop.xlane.xlu0 %382
        %v384 = vadd.f32 %v374, %v375
        %385 = vadd.xlane.f32.xlu0 %v384
        %v386 = vpop.xlane.xlu0 %385
        %v387 = vadd.f32 %v376, %v377
        %388 = vadd.xlane.f32.xlu0 %v387
        %v389 = vpop.xlane.xlu0 %388
        %v390 = vmul.f32 %v380, 0.00390625
        %v391 = vmul.f32 %v383, 0.00390625
        %v392 = vmul.f32 %v386, 0.00390625
        %v393 = vmul.f32 %v389, 0.00390625
        %v394 = vmul.f32 %v277, %v390
        %v395 = vmul.f32 %v278, %v391
        %v396 = vmul.f32 %v279, %v392
        %v397 = vmul.f32 %v280, %v393
        %v398 = vadd.f32 %v394, %v281
        %v399 = vadd.f32 %v395, %v282
        %v400 = vadd.f32 %v396, %v283
        %v401 = vadd.f32 %v397, %v284
        %403 = vset.pattern.permute.xlu0 0
        %404 = vperm.xlu0 %403, %v398
        %v405 = vpop.permute.xlu0 %404
        %408 = vset.pattern.permute.xlu0 0
        %409 = vperm.xlu0 %408, %v399
        %v410 = vpop.permute.xlu0 %409
        %413 = vset.pattern.permute.xlu0 0
        %414 = vperm.xlu0 %413, %v400
        %v415 = vpop.permute.xlu0 %414
        %418 = vset.pattern.permute.xlu0 0
        %419 = vperm.xlu0 %418, %v401
        %v420 = vpop.permute.xlu0 %419
        %v422 = vmul.f32 %v285, %v405
        %v423 = vmul.f32 %v286, %v410
        %v424 = vmul.f32 %v287, %v415
        %v425 = vmul.f32 %v288, %v420
        %vm426 = vcmask 31744
        %v427 = vsel %vm426, %v422, 0.0
        %v428 = vsel %vm426, %v423, 0.0
        %v429 = vadd.f32 %v427, %v428
        %v430 = vsel %vm426, %v424, 0.0
        %v431 = vadd.f32 %v429, %v430
        %v432 = vsel %vm426, %v425, 0.0
        %v433 = vadd.f32 %v431, %v432
        %v434 = vrot.slane %v433, 4
        %v435 = vadd.f32 %v433, %v434
        %v436 = vrot.slane %v435, 2
        %v437 = vadd.f32 %v435, %v436
        %v438 = vrot.slane %v437, 1
        %v439 = vadd.f32 %v437, %v438
        %v440 = vadd.f32 %v439, %v289
        %v441 = vmul.f32 %v440, 0.5
        %v442 = vmul.f32 %v440, 0.70710677
        %v443 = vand.u32 2147483647, %v442
        %v444 = vmul.f32 %v443, 0.3275911
        %v445 = vadd.f32 %v444, 1.0
        %v446 = vrcp.pop %v445
        %v447 = vmul.f32 1.0, %v446
        %v448 = vmul.f32 %v447, 1.0614054
        %v449 = vadd.f32 %v448, -1.4531521
        %v450 = vmul.f32 %v447, %v449
        %v451 = vadd.f32 %v450, 1.4214138
        %v452 = vmul.f32 %v447, %v451
        %v453 = vadd.f32 %v452, -0.28449672
        %v454 = vmul.f32 %v447, %v453
        %v455 = vadd.f32 %v454, 0.2548296
        %v456 = vmul.f32 %v447, %v455
        %v457 = vsub.f32 0.0, %v443
        %v458 = vmul.f32 %v457, %v443
        %v459 = vmul.f32 %v458, 1.442695
        %v460 = vpow.pop %v459
        %v461 = vmul.f32 %v456, %v460
        %v462 = vsub.f32 1.0, %v461
        %vm463 = vcmp.ge.f32.partialorder %v442, 0.0
        %v464 = vsub.f32 0.0, %v462
        %v465 = vsel %vm463, %v462, %v464
        %v466 = vadd.f32 %v465, 1.0
        %v467 = vmul.f32 %v441, %v466
        %v468 = vlaneseq
        %v469 = vshrl.u32 %v468, 7
        %v470 = vsub.s32 0, %v469
        %v471 = vrot.slane %v467, %v470
        %v472 = vmul.f32 %v290, %v471
        %v473 = vmul.f32 %v291, %v471
        %v474 = vmul.f32 %v292, %v471
        %v475 = vmul.f32 %v293, %v471
        %v476 = vsel %vm426, %v472, 0.0
        %477 = vadd.xlane.f32.xlu0 %v476
        %v478 = vpop.xlane.xlu0 %477
        %v479 = vsel %vm426, %v473, 0.0
        %480 = vadd.xlane.f32.xlu0 %v479
        %v481 = vpop.xlane.xlu0 %480
        %v482 = vsel %vm426, %v474, 0.0
        %483 = vadd.xlane.f32.xlu0 %v482
        %v484 = vpop.xlane.xlu0 %483
        %v485 = vsel %vm426, %v475, 0.0
        %486 = vadd.xlane.f32.xlu0 %v485
        %v487 = vpop.xlane.xlu0 %486
        %v488 = vadd.f32 %v478, %v294
        %v489 = vadd.f32 %v481, %v295
        %v490 = vadd.f32 %v484, %v296
        %v491 = vadd.f32 %v487, %v297
        %v492 = vxor.u32 %v488, 2147483648
        %v493 = vxor.u32 %v489, 2147483648
        %v494 = vxor.u32 %v490, 2147483648
        %v495 = vxor.u32 %v491, 2147483648
        %v496 = vmul.f32 %v492, 1.442695
        %v497 = vpow.pop %v496
        %v498 = vmul.f32 %v493, 1.442695
        %v499 = vpow.pop %v498
        %v500 = vmul.f32 %v494, 1.442695
        %v501 = vpow.pop %v500
        %v502 = vmul.f32 %v495, 1.442695
        %v503 = vpow.pop %v502
        %v504 = vadd.f32 %v497, 1.0
        %v505 = vadd.f32 %v499, 1.0
        %v506 = vadd.f32 %v501, 1.0
        %v507 = vadd.f32 %v503, 1.0
        %v508 = vrcp.pop %v504
        %v509 = vmul.f32 1.0, %v508
        %v510 = vrcp.pop %v505
        %v511 = vmul.f32 1.0, %v510
        %v512 = vrcp.pop %v506
        %v513 = vmul.f32 1.0, %v512
        %v514 = vrcp.pop %v507
        %v515 = vmul.f32 1.0, %v514
        %517 = vset.pattern.permute.xlu0 0
        %518 = vperm.xlu0 %517, %v509
        %v519 = vpop.permute.xlu0 %518
        %522 = vset.pattern.permute.xlu0 0
        %523 = vperm.xlu0 %522, %v511
        %v524 = vpop.permute.xlu0 %523
        %527 = vset.pattern.permute.xlu0 0
        %528 = vperm.xlu0 %527, %v513
        %v529 = vpop.permute.xlu0 %528
        %532 = vset.pattern.permute.xlu0 0
        %533 = vperm.xlu0 %532, %v515
        %v534 = vpop.permute.xlu0 %533
        %v536 = vmul.f32 %v298, %v519
        %v537 = vmul.f32 %v299, %v519
        %v538 = vmul.f32 %v300, %v524
        %v539 = vmul.f32 %v301, %v524
        %v540 = vmul.f32 %v302, %v529
        %v541 = vmul.f32 %v303, %v529
        %v542 = vmul.f32 %v304, %v534
        %v543 = vmul.f32 %v305, %v534
        %544 = vst [vmem:[%s271] sm:$0xff] %v536
        %545 = vst [vmem:[%s271 + $0x8] sm:$0xff] %v537
        %546 = vst [vmem:[%s271 + $0x10] sm:$0xff] %v538
        %547 = vst [vmem:[%s271 + $0x18] sm:$0xff] %v539
        %548 = vst [vmem:[%s271 + $0x20] sm:$0xff] %v540
        %549 = vst [vmem:[%s271 + $0x28] sm:$0xff] %v541
        %550 = vst [vmem:[%s271 + $0x30] sm:$0xff] %v542
        %551 = vst [vmem:[%s271 + $0x38] sm:$0xff] %v543
        %s552 = sand.u32 %s181, 1
        %s553 = scalar_lea.sflag [#allocation3], %s552
        %s554 = sand.u32 %s181, 1
        %s555 = smul.addr %s554, 64
        %s556 = scalar_lea.vmem [#allocation2], %s555
        // Predicated region
        $region49: #{tpu_custom_call.1} parent=47 // pred_check
          %p557 = pneg %p191
        $region50: #{tpu_custom_call.1} parent=47 // pred_check_branch
          %559 = sbr.rel (%p557) target = $region52
        $region51: #{tpu_custom_call.1} parent=47 // pred_region
          %s561 = ssub.s32 1024, 1024
          %562 = vsyncadd %s553, %s561
          %s563 = smul.addr %s21, 8
          %s564 = smul.addr %s563, 128
          %s565 = scalar_lea.hbm %s7, %s564
          %s566 = sshll.u32 %s556, 4
          %s567 = int_to_ptr.vmem [resolvable:$true] %s566
          %572 = dma.vmem_to_hbm [thread:$0]  %s567, 1024, %s565, %s553, 256, 256, 16
        $region52: #{tpu_custom_call.1} parent=47 // pred_fallthru
          _
      $region48: #{tpu_custom_call.1} parent=5 // pred_fallthru
        _
      %p573 = scmp.le.s32.totalorder 2, %s16
      // Predicated region
      $region53: #{tpu_custom_call.1} parent=5 // pred_check
        %p574 = pneg %p573
      $region54: #{tpu_custom_call.1} parent=5 // pred_check_branch
        %576 = sbr.rel (%p574) target = $region56
      $region55: #{tpu_custom_call.1} parent=5 // pred_region
        %s577 = ssub.s32 %s16, 2
        // Predicated region
        $region57: #{tpu_custom_call.1} parent=55 // pred_check
          %p578 = pneg %p197
        $region58: #{tpu_custom_call.1} parent=55 // pred_check_branch
          %580 = sbr.rel (%p578) target = $region60
        $region59: #{tpu_custom_call.1} parent=55 // pred_region
          %s581 = sand.u32 %s182, 1
          %s582 = scalar_lea.sflag [#allocation3], %s581
          %s583 = sand.u32 %s182, 1
          %s584 = smul.addr %s583, 64
          %s585 = scalar_lea.vmem [#allocation2], %s584
          %586 = dma.done %s582, 1024
        $region60: #{tpu_custom_call.1} parent=55 // pred_fallthru
          _
      $region56: #{tpu_custom_call.1} parent=5 // pred_fallthru
        _
    $region6: #{tpu_custom_call.1} parent=1 // loop_footer
      %s20 = sadd.s32 1, %s16
    $region7: #{tpu_custom_call.1} parent=1 // loop_footer_branch
      %15 = sbr.rel target = $region3
    $region8: #{tpu_custom_call.1} parent=1 // loop_exit
      _
    %587 = vsyncpa [#allocation3], 1
    %s588 = scalar_lea.sflag [#allocation3], 1
    %589 = vsyncpa %s588, 1

</llo_original>
